<compile_context>
chip_gen: v5e
topology: v5e:2x2
jax: 0.10.0
libtpu: 0.0.40
codegen_flags: <defaults>
</compile_context>

<pallas_src>
import functools

import jax
import jax.numpy as jnp
from jax.experimental import pallas as pl
from jax.experimental.pallas import tpu as pltpu

EPS = 1e-6  # matches torch.nn.functional.pairwise_distance default eps

_MIB = 1024 * 1024
# Per-buffer input-tile DMA target: ~2-4 MiB reaches ~85% of HBM roofline;
# bigger tiles only cost VMEM without improving streaming efficiency.
_MAX_INPUT_TILE_BYTES = 4 * _MIB


def _vmem_budget_and_limit():
    """Per-generation (footprint budget, explicit scoped-VMEM limit) in bytes."""
    try:
        cap = int(getattr(pltpu.get_tpu_info(), "vmem_capacity_bytes", 0))
    except Exception:  # no hardware info available -> be conservative
        cap = 0
    if cap >= 100 * _MIB:
        # v5e / v6e: 128 MiB physical VMEM per TensorCore.
        return 64 * _MIB, 96 * _MIB
    # v7x (64 MiB per TensorCore) or unknown: stay well under 64 MiB.
    return 36 * _MIB, 48 * _MIB


def _round_up(x, m):
    return ((x + m - 1) // m) * m


def _pick_block_b(B, D, itemsize, vmem_budget):
    # Per-row VMEM bytes for one grid step (the pipeline double-buffers each
    # operand):
    #   inputs:              2 arrays * 2 buffers * D * itemsize
    #   f32 upcasts / temps: ~3 * D * 4   (o1_f32 / o2_f32 / diff live window)
    #   label tile:          2 buffers * ~512 B (lane-padded (tb, 1) block)
    per_row = 4 * D * itemsize + 12 * D + 1024
    rows_vmem = vmem_budget // per_row
    rows_dma = _MAX_INPUT_TILE_BYTES // max(1, D * itemsize)
    tb = min(rows_vmem, rows_dma)
    return max(8, (tb // 8) * 8)


def _contrastive_kernel(o1_ref, o2_ref, label_ref, psum_ref, *,
                        margin, batch, block_b):
    # Upcast in-kernel so HBM traffic stays at the inputs' native width.
    o1 = o1_ref[...].astype(jnp.float32)                     # (TB, D)
    o2 = o2_ref[...].astype(jnp.float32)                     # (TB, D)
    lab = label_ref[...].astype(jnp.float32)                 # (TB, 1)

    # F.pairwise_distance(x1, x2, p=2, eps=1e-6, keepdim=True)
    diff = o1 - o2 + EPS
    sq_dist = jnp.sum(diff * diff, axis=-1, keepdims=True)   # (TB, 1)
    dist = jnp.sqrt(sq_dist)                                  # (TB, 1)

    # (1 - y) * d^2 + y * clamp(margin - d, 0)^2
    pos_term = (1.0 - lab) * (dist * dist)
    clamped = jnp.maximum(margin - dist, 0.0)
    neg_term = lab * (clamped * clamped)
    per_pair = pos_term + neg_term                            # (TB, 1)

    # Mask padded tail rows of the final tile (garbage / possibly NaN input
    # rows) BEFORE the cross-row reduction.
    row = (jax.lax.broadcasted_iota(jnp.int32, per_pair.shape, 0)
           + pl.program_id(0) * block_b)
    per_pair = jnp.where(row < batch, per_pair, 0.0)

    # One partial sum per tile: output blocks stay disjoint per grid step, so
    # the batch axis remains "parallel" (v7x megacore sharding preserved).
    psum_ref[...] = jnp.sum(per_pair, keepdims=True).reshape(1, 1, 1)


def contrastive_loss(output1, output2, label, margin=1.0, block_b=None):
    """Contrastive (siamese) loss.

    Callers should pass bf16/f16 embeddings when available: the kernel is
    HBM-bandwidth bound and upcasts to f32 inside VMEM, so halving the input
    width roughly halves wall-clock with no wrapper-side .astype copy.
    """
    B, D = output1.shape
    assert output2.shape == (B, D)
    label = jnp.reshape(label, (B, 1))

    vmem_budget, vmem_limit = _vmem_budget_and_limit()
    if block_b is None:
        block_b = _pick_block_b(B, D, jnp.dtype(output1.dtype).itemsize,
                                vmem_budget)

    if B <= 8:
        tb = B                       # single tiny tile (block == full dims)
    elif B <= block_b:
        # Split into >=2 tiles so "parallel" can use both v7x TensorCores.
        tb = min(block_b, _round_up(pl.cdiv(B, 2), 8))
    else:
        tb = block_b
    num_tiles = pl.cdiv(B, tb)

    psums = pl.pallas_call(
        functools.partial(_contrastive_kernel, margin=float(margin),
                          batch=B, block_b=tb),
        out_shape=jax.ShapeDtypeStruct((num_tiles, 1, 1), jnp.float32),
        grid=(num_tiles,),
        in_specs=[
            pl.BlockSpec((tb, D), lambda i: (i, 0)),
            pl.BlockSpec((tb, D), lambda i: (i, 0)),
            pl.BlockSpec((tb, 1), lambda i: (i, 0)),
        ],
        out_specs=pl.BlockSpec((1, 1, 1), lambda i: (i, 0, 0)),
        compiler_params=pltpu.CompilerParams(
            dimension_semantics=("parallel",),
            vmem_limit_bytes=vmem_limit),
    )(output1, output2, label)

    # O(num_tiles) finish in the wrapper: exact mean over all B pairs.
    return jnp.sum(psums) / jnp.float32(B)


def _reference(output1, output2, label, margin=1.0):
    o1 = output1.astype(jnp.float32)
    o2 = output2.astype(jnp.float32)
    lab = label.reshape(-1, 1).astype(jnp.float32)
    diff = o1 - o2 + EPS
    dist = jnp.sqrt(jnp.sum(diff * diff, axis=-1, keepdims=True))
    per = (1.0 - lab) * dist ** 2 + lab * jnp.maximum(margin - dist, 0.0) ** 2
    return jnp.mean(per)


if __name__ == "__main__":
    key = jax.random.PRNGKey(0)
    k1, k2, k3, k4, k5, k6 = jax.random.split(key, 6)

    # Small shapes consistent with the module: batch=8, hidden=32.
    B, D = 8, 32
    o1 = jax.random.normal(k1, (B, D), dtype=jnp.float32)
    o2 = jax.random.normal(k2, (B, D), dtype=jnp.float32)
    lab = jax.random.bernoulli(k3, 0.5, (B, 1)).astype(jnp.float32)

    loss = jax.block_until_ready(contrastive_loss(o1, o2, lab))
    ref = _reference(o1, o2, lab)
    assert jnp.allclose(loss, ref, rtol=1e-5, atol=1e-5), (loss, ref)

    # bf16 inputs: no wrapper upcast; kernel upcasts in VMEM (half the HBM bytes).
    loss_bf16 = jax.block_until_ready(
        contrastive_loss(o1.astype(jnp.bfloat16), o2.astype(jnp.bfloat16), lab))
    assert jnp.allclose(loss_bf16, ref, rtol=5e-2, atol=1e-2), (loss_bf16, ref)

    # >=2-tile path with a masked remainder tile (B=20 -> tb=16 -> 2 steps).
    B2 = 20
    o1b = jax.random.normal(k4, (B2, D), dtype=jnp.float32)
    o2b = jax.random.normal(k5, (B2, D), dtype=jnp.float32)
    labb = jax.random.bernoulli(k6, 0.5, (B2, 1)).astype(jnp.float32)
    loss2 = jax.block_until_ready(contrastive_loss(o1b, o2b, labb))
    ref2 = _reference(o1b, o2b, labb)
    assert jnp.allclose(loss2, ref2, rtol=1e-5, atol=1e-5), (loss2, ref2)

    # Explicit small block: 3 grid steps incl. a masked remainder tile.
    loss3 = jax.block_until_ready(contrastive_loss(o1b, o2b, labb, block_b=8))
    assert jnp.allclose(loss3, ref2, rtol=1e-5, atol=1e-5), (loss3, ref2)

    print("KERNEL_OK")
</pallas_src>

<mosaic_0001>
module attributes {stable_mosaic.version = 11 : i64} {
  func.func @_contrastive_kernel(%arg0: i32, %arg1: memref<8x32xf32, #tpu.memory_space<vmem>>, %arg2: memref<8x32xf32, #tpu.memory_space<vmem>>, %arg3: memref<8x1xf32, #tpu.memory_space<vmem>>, %arg4: memref<1x1x1xf32, #tpu.memory_space<vmem>>) attributes {dimension_semantics = [#tpu.dimension_semantics<parallel>], iteration_bounds = array<i64: 1>, scalar_prefetch = 0 : i64, scratch_operands = 0 : i64, tpu.core_type = #tpu.core_type<tc>, window_params = [{transform_indices = @transform_0, window_bounds = array<i64: 8, 32>}, {transform_indices = @transform_1, window_bounds = array<i64: 8, 32>}, {transform_indices = @transform_2, window_bounds = array<i64: 8, 1>}, {transform_indices = @transform_3, window_bounds = array<i64: 1, 1, 1>}]} {
    %c0 = arith.constant 0 : index
    %c0_0 = arith.constant 0 : index
    %0 = vector.load %arg1[%c0, %c0_0] : memref<8x32xf32, #tpu.memory_space<vmem>>, vector<8x32xf32>
    %c0_1 = arith.constant 0 : index
    %c0_2 = arith.constant 0 : index
    %1 = vector.load %arg2[%c0_1, %c0_2] : memref<8x32xf32, #tpu.memory_space<vmem>>, vector<8x32xf32>
    %c0_3 = arith.constant 0 : index
    %c0_4 = arith.constant 0 : index
    %2 = vector.load %arg3[%c0_3, %c0_4] : memref<8x1xf32, #tpu.memory_space<vmem>>, vector<8x1xf32>
    %3 = arith.subf %0, %1 : vector<8x32xf32>
    %cst = arith.constant 9.99999997E-7 : f32
    %4 = vector.broadcast %cst : f32 to vector<8x32xf32>
    %5 = arith.addf %3, %4 : vector<8x32xf32>
    %6 = arith.mulf %5, %5 : vector<8x32xf32>
    %cst_5 = arith.constant dense<0.000000e+00> : vector<8xf32>
    %7 = vector.multi_reduction <add>, %6, %cst_5 [1] : vector<8x32xf32> to vector<8xf32>
    %8 = vector.shape_cast %7 : vector<8xf32> to vector<8x1xf32>
    %9 = math.sqrt %8 : vector<8x1xf32>
    %cst_6 = arith.constant 1.000000e+00 : f32
    %10 = vector.broadcast %cst_6 : f32 to vector<8x1xf32>
    %11 = arith.subf %10, %2 : vector<8x1xf32>
    %12 = arith.mulf %9, %9 : vector<8x1xf32>
    %13 = arith.mulf %11, %12 : vector<8x1xf32>
    %cst_7 = arith.constant 1.000000e+00 : f32
    %14 = vector.broadcast %cst_7 : f32 to vector<8x1xf32>
    %15 = arith.subf %14, %9 : vector<8x1xf32>
    %cst_8 = arith.constant 0.000000e+00 : f32
    %16 = vector.broadcast %cst_8 : f32 to vector<8x1xf32>
    %17 = arith.maximumf %15, %16 : vector<8x1xf32>
    %18 = arith.mulf %17, %17 : vector<8x1xf32>
    %19 = arith.mulf %2, %18 : vector<8x1xf32>
    %20 = arith.addf %13, %19 : vector<8x1xf32>
    %21 = tpu.iota {dimensions = array<i32: 0>} : vector<8x1xi32>
    %c8_i32 = arith.constant 8 : i32
    %22 = arith.muli %arg0, %c8_i32 : i32
    %23 = vector.broadcast %22 : i32 to vector<8x1xi32>
    %24 = arith.addi %21, %23 : vector<8x1xi32>
    %c8_i32_9 = arith.constant 8 : i32
    %25 = vector.broadcast %c8_i32_9 : i32 to vector<8x1xi32>
    %26 = arith.cmpi slt, %24, %25 : vector<8x1xi32>
    %cst_10 = arith.constant 0.000000e+00 : f32
    %27 = vector.broadcast %cst_10 : f32 to vector<8x1xf32>
    %28 = arith.select %26, %20, %27 : vector<8x1xi1>, vector<8x1xf32>
    %29 = vector.shape_cast %28 : vector<8x1xf32> to vector<1x8x1xf32>
    %cst_11 = arith.constant dense<0.000000e+00> : vector<1xf32>
    %30 = vector.multi_reduction <add>, %29, %cst_11 [1, 2] : vector<1x8x1xf32> to vector<1xf32>
    %31 = vector.shape_cast %30 : vector<1xf32> to vector<1x1x1xf32>
    %32 = vector.extract %31[0, 0, 0] : f32 from vector<1x1x1xf32>
    %33 = vector.broadcast %32 : f32 to vector<1x1xf32>
    %34 = vector.shape_cast %33 : vector<1x1xf32> to vector<1x1x1xf32>
    %c0_12 = arith.constant 0 : index
    %c0_13 = arith.constant 0 : index
    %c0_14 = arith.constant 0 : index
    %35 = vector.load %arg4[%c0_12, %c0_13, %c0_14] : memref<1x1x1xf32, #tpu.memory_space<vmem>>, vector<1x1x1xf32>
    tpu.vector_store %arg4[%c0_12, %c0_13, %c0_14], %34 {strides = array<i32>} : memref<1x1x1xf32, #tpu.memory_space<vmem>>, vector<1x1x1xf32>,
    return
  }
  func.func @transform_0(%arg0: i32) -> (i32, i32) {
    %c0_i32 = arith.constant 0 : i32
    %c0_i32_0 = arith.constant 0 : i32
    return %arg0, %c0_i32 : i32, i32
  }
  func.func @transform_1(%arg0: i32) -> (i32, i32) {
    %c0_i32 = arith.constant 0 : i32
    %c0_i32_0 = arith.constant 0 : i32
    return %arg0, %c0_i32 : i32, i32
  }
  func.func @transform_2(%arg0: i32) -> (i32, i32) {
    %c0_i32 = arith.constant 0 : i32
    %c0_i32_0 = arith.constant 0 : i32
    return %arg0, %c0_i32 : i32, i32
  }
  func.func @transform_3(%arg0: i32) -> (i32, i32, i32) {
    %c0_i32 = arith.constant 0 : i32
    %c0_i32_0 = arith.constant 0 : i32
    %c0_i32_1 = arith.constant 0 : i32
    return %arg0, %c0_i32, %c0_i32_0 : i32, i32, i32
  }
}

</mosaic_0001>

<llo_original>
// kernel: tpu_custom_call.1
$region0: #{tpu_custom_call.1}
  #allocation0 [shape = 'u32[]', space=smem, size = 0x4, offset = 0x4, fixed_abs, tag = 'smem constant byte address 0x4 - core index']
  #allocation1 [shape = 'u32[72,128]{1,0:T(1,128)}', space=vmem, size = 0x9000, scoped, tag = 'internal scratch']
  %s0 = inlined_call_operand.vmem [shape: f32[8,32], index: 0, kind: input, shape index: {}]
  %s1 = inlined_call_operand.hbm [shape: f32[8,32], index: 1, kind: input, shape index: {}]
  %s2 = inlined_call_operand.vmem [shape: f32[8,1], index: 2, kind: input, shape index: {}]
  %s3 = inlined_call_operand.hbm [shape: f32[1,1,1], index: 3, kind: output, shape index: {}]
  %s4 = sld [smem:[#allocation0]]
  $region26: #{tpu_custom_call.1} parent=0
    _
  %s6 = ssub.s32 1, %s4
  %s7 = scalar_select 0, %s6, %s4
  $region1: #{tpu_custom_call.1} parent=0
    #allocation2 [shape = 'u8[4096]{0}', space=vmem, size = 0x1000, scoped, tag = 'input window, operand 1, single buffered']
    #allocation3 [shape = 's32[1]{0}', space=sflag, size = 0x4, scoped, tag = 'scoped memory for tpu_custom_call.1']
    #allocation4 [shape = 's32[1]{0}', space=sflag, size = 0x4, scoped, tag = 'scoped memory for tpu_custom_call.1']
    #allocation5 [shape = 'u8[512]{0}', space=vmem, size = 0x400, scoped, tag = 'output window, operand 0, single buffered']
    %8 = vsyncpa [#allocation3], 0
    %9 = vsyncpa [#allocation4], 0
    // Predicated region
    $region2: #{tpu_custom_call.1} parent=1 // pred_check
      _
    $region3: #{tpu_custom_call.1} parent=1 // pred_check_branch
      %11 = sbr.rel (0) target = $region5
    $region4: #{tpu_custom_call.1} parent=1 // pred_region
      _
    $region5: #{tpu_custom_call.1} parent=1 // pred_fallthru
      _
    // Predicated region
    $region6: #{tpu_custom_call.1} parent=1 // pred_check
      _
    $region7: #{tpu_custom_call.1} parent=1 // pred_check_branch
      %13 = sbr.rel (0) target = $region9
    $region8: #{tpu_custom_call.1} parent=1 // pred_region
      %15 = vsyncadd [#allocation3], 0
      %s17 = sshll.u32 %s1, 4
      %s18 = int_to_ptr.hbm [resolvable:$true] %s17
      %s19 = sshll.u32 [#allocation2], 4
      %s20 = int_to_ptr.vmem [resolvable:$true] %s19
      %22 = dma.hbm_to_vmem [thread:$0]  %s18, 128, %s20, [#allocation3]
    $region9: #{tpu_custom_call.1} parent=1 // pred_fallthru
      _
    // Predicated region
    $region10: #{tpu_custom_call.1} parent=1 // pred_check
      _
    $region11: #{tpu_custom_call.1} parent=1 // pred_check_branch
      %24 = sbr.rel (0) target = $region13
    $region12: #{tpu_custom_call.1} parent=1 // pred_region
      _
    $region13: #{tpu_custom_call.1} parent=1 // pred_fallthru
      _
    // Predicated region
    $region14: #{tpu_custom_call.1} parent=1 // pred_check
      _
    $region15: #{tpu_custom_call.1} parent=1 // pred_check_branch
      %26 = sbr.rel (0) target = $region17
    $region16: #{tpu_custom_call.1} parent=1 // pred_region
      %28 = dma.done [#allocation3], 128
    $region17: #{tpu_custom_call.1} parent=1 // pred_fallthru
      _
    %v29 = vld [vmem:[%s0] sm:$0xff]
    %v30 = vld [vmem:[#allocation2] sm:$0xff]
    %v31 = vld [vmem:[%s2] sm:$0xff]
    %v32 = vsub.f32 %v29, %v30
    %v33 = vadd.f32 %v32, 1e-06
    %v34 = vmul.f32 %v33, %v33
    %vm35 = vcmask 261120
    %v36 = vsel %vm35, %v34, 0.0
    %37 = vadd.xlane.f32.xlu0 %v36
    %v38 = vpop.xlane.xlu0 %37
    %v39 = vrsqrt.pop %v38
    %v40 = vmul.f32 %v39, %v38
    %v41 = vmul.f32 %v40, %v39
    %v42 = vmul.f32 0.5, %v41
    %v43 = vsub.f32 1.5, %v42
    %v44 = vmul.f32 %v39, %v43
    %v45 = vmul.f32 %v38, %v44
    %vm46 = vcmp.eq.f32.partialorder %v38, inf
    %v47 = vsel %vm46, %v38, %v45
    %vm48 = vcmp.eq.f32.partialorder %v38, 0.0
    %v49 = vand.u32 %v38, 2147483648
    %v50 = vsel %vm48, %v49, %v47
    %v51 = vsub.f32 1.0, %v31
    %v52 = vmul.f32 %v50, %v50
    %v53 = vmul.f32 %v51, %v52
    %v54 = vsub.f32 1.0, %v50
    %v55 = vmax.f32 %v54, 0.0
    %v56 = vmul.f32 %v55, %v55
    %v57 = vmul.f32 %v31, %v56
    %v58 = vadd.f32 %v53, %v57
    %v59 = vlaneseq
    %v60 = vshrl.u32 %v59, 7
    %s61 = smul.u32 0, 8
    %v62 = vstv %s61
    %v63 = vadd.s32 %v60, %v62
    %vm64 = vcmp.lt.s32.totalorder %v63, 8
    %v65 = vsel %vm64, %v58, 0.0
    %vm66 = vcmask 7168
    %v67 = vsel %vm66, %v65, 0.0
    %68 = vadd.xlane.f32.xlu0 %v67
    %v69 = vpop.xlane.xlu0 %68
    %v70 = vrot.slane %v69, 4
    %v71 = vadd.f32 %v69, %v70
    %v72 = vrot.slane %v71, 2
    %v73 = vadd.f32 %v71, %v72
    %v74 = vrot.slane %v73, 1
    %v75 = vadd.f32 %v73, %v74
    %s76 = vtos %v75
    %v77 = vstv %s76
    %vm78 = vcmask 0
    %79 = vst.msk [vmem:[#allocation5] sm:$0x1] %vm78, %v77
    // Predicated region
    $region18: #{tpu_custom_call.1} parent=1 // pred_check
      _
    $region19: #{tpu_custom_call.1} parent=1 // pred_check_branch
      %81 = sbr.rel (0) target = $region21
    $region20: #{tpu_custom_call.1} parent=1 // pred_region
      %83 = vsyncadd [#allocation4], 0
      %s85 = sshll.u32 [#allocation5], 4
      %s86 = int_to_ptr.vmem [resolvable:$true] %s85
      %s87 = sshll.u32 %s3, 4
      %s88 = int_to_ptr.hbm [resolvable:$true] %s87
      %90 = dma.vmem_to_hbm [thread:$0]  %s86, 16, %s88, [#allocation4]
    $region21: #{tpu_custom_call.1} parent=1 // pred_fallthru
      _
    // Predicated region
    $region22: #{tpu_custom_call.1} parent=1 // pred_check
      _
    $region23: #{tpu_custom_call.1} parent=1 // pred_check_branch
      %92 = sbr.rel (0) target = $region25
    $region24: #{tpu_custom_call.1} parent=1 // pred_region
      %94 = dma.done [#allocation4], 16
    $region25: #{tpu_custom_call.1} parent=1 // pred_fallthru
      _
    %95 = vsyncpa [#allocation3], 1
    %96 = vsyncpa [#allocation4], 1

</llo_original>
